<compile_context>
chip_gen: v7x
topology: tpu7x:2x2x1
jax: 0.10.0
libtpu: 0.0.40
codegen_flags: <defaults>
</compile_context>

<pallas_src>
import functools
import math

import jax
import jax.numpy as jnp
from jax.experimental import pallas as pl
from jax.experimental.pallas import tpu as pltpu

_MIB = 1024 * 1024
_CPAD = 128  # lane-dense padded width for the tiny final layer


# ---------------------------------------------------------------------------
# Tiling / budget helpers
# ---------------------------------------------------------------------------
def _vmem_capacity_bytes():
    """Physical VMEM per TensorCore; conservative 64 MiB if the query fails."""
    try:
        cap = int(pltpu.get_tpu_info().vmem_capacity_bytes)
        if cap > 0:
            return cap
    except Exception:
        pass
    return 64 * _MIB


def _vmem_budget():
    """(vmem_limit_bytes, per-pipeline-buffer weight-tile cap) per generation."""
    cap = _vmem_capacity_bytes()
    if cap >= 100 * _MIB:          # v5e / v6e: 128 MiB physical VMEM
        return 96 * _MIB, 16 * _MIB
    return 48 * _MIB, 7 * _MIB     # v7x: 64 MiB physical VMEM per TensorCore


def _largest_divisor_tile(dim, cap, granules):
    """Largest t <= cap with dim % t == 0, preferring multiples of bigger granules."""
    cap = min(cap, dim)
    for g in granules:
        t = (cap // g) * g
        while t >= g:
            if dim % t == 0:
                return t
            t -= g
    return None


def _choose_tm(M, cap=256):
    if M <= cap:
        return M
    t = _largest_divisor_tile(M, cap, (256, 128, 8))
    return t if t is not None else M


def _choose_tn(N, max_tn):
    """Lane-dense output tile; prefer an EVEN j-tile count (v7x megacore balance)."""
    if N <= 256:
        return N
    cap = min(max_tn, N // 2)
    fallback = None
    for g in (512, 256, 128):
        t = (cap // g) * g
        while t >= g:
            if N % t == 0:
                if (N // t) % 2 == 0:
                    return t
                if fallback is None:
                    fallback = t
            t -= g
    return fallback if fallback is not None else N


def _choose_tk(K, tn, max_tk, vmem_limit, fixed_bytes, per_buf_cap):
    """K-tile so a double-buffered bf16 weight tile fits the remaining VMEM budget."""
    budget = vmem_limit - fixed_bytes - 2 * _MIB        # slack for compiler temporaries
    w_per_buf = max(budget // 2, 256 * 1024)
    w_per_buf = min(w_per_buf, per_buf_cap)
    tk_cap = max(256, w_per_buf // (tn * 2))            # bf16 weights
    tk_cap = min(tk_cap, K, max_tk)
    t = _largest_divisor_tile(K, tk_cap, (256, 128, 8))
    return t if t is not None else K


def _align_hint(t):
    for a in (256, 128, 8):
        if t % a == 0:
            return a
    return 1


def _x_spec(block_shape, index_map, single_buffer):
    """x row-tile spec; single-buffered when supported (index constant in j, k)."""
    if single_buffer and hasattr(pl, "Buffered"):
        try:
            return pl.BlockSpec(block_shape, index_map, pipeline_mode=pl.Buffered(1))
        except TypeError:  # pipeline_mode kwarg unavailable in this jax version
            pass
    return pl.BlockSpec(block_shape, index_map)


# ---------------------------------------------------------------------------
# Kernels
# ---------------------------------------------------------------------------
def _linear_kernel(x_ref, w_ref, b_ref, o_ref, acc_ref, *, activation, tk, k_align):
    """One (tm, tn) output tile; x row-tile is VMEM-resident, k is the reduction axis."""
    k = pl.program_id(2)

    @pl.when(k == 0)
    def _():
        acc_ref[...] = jnp.zeros_like(acc_ref)

    k_start = pl.multiple_of(k * tk, k_align)
    acc_ref[...] += jnp.dot(x_ref[:, pl.ds(k_start, tk)], w_ref[...],
                            preferred_element_type=jnp.float32)

    @pl.when(k == pl.num_programs(2) - 1)
    def _():
        out = acc_ref[...] + b_ref[...]            # (tm, tn) + (1, tn), f32
        if activation == "relu":
            out = jnp.maximum(out, 0.0)
        elif activation == "sigmoid":
            out = jax.nn.sigmoid(out)
        o_ref[...] = out.astype(o_ref.dtype)


def _fused_l23_kernel(x_ref, w2_ref, b2_ref, w3_ref, yp_ref, acc_ref, *, tk, k_align):
    """Fused Linear->ReLU->[Dropout]->Linear: hidden tile never leaves VMEM."""
    k = pl.program_id(2)

    @pl.when(k == 0)
    def _():
        acc_ref[...] = jnp.zeros_like(acc_ref)

    k_start = pl.multiple_of(k * tk, k_align)
    acc_ref[...] += jnp.dot(x_ref[:, pl.ds(k_start, tk)], w2_ref[...],
                            preferred_element_type=jnp.float32)

    @pl.when(k == pl.num_programs(2) - 1)
    def _():
        h = jnp.maximum(acc_ref[...] + b2_ref[...], 0.0)       # ReLU, f32 (tm, tn)
        # Dropout(p=0.5): identity at inference.
        part = jnp.dot(h.astype(jnp.bfloat16), w3_ref[...],
                       preferred_element_type=jnp.float32)      # (tm, _CPAD)
        yp_ref[...] = part[None].astype(yp_ref.dtype)


# ---------------------------------------------------------------------------
# Wrappers
# ---------------------------------------------------------------------------
def linear_pallas(x, w, b, *, activation=None, out_dtype=jnp.bfloat16,
                  max_tn=2048, max_tk=4096):
    """y = act(x @ w + b).  x:[M,K], w:[K,N], b:[N].  bf16 inputs, f32 accumulation."""
    M0, K = x.shape
    Kw, N = w.shape
    assert K == Kw and b.shape == (N,)

    # Pre-cast weights once with prepare_fc_params(); these are no-ops then.
    x = x if x.dtype == jnp.bfloat16 else x.astype(jnp.bfloat16)
    w = w if w.dtype == jnp.bfloat16 else w.astype(jnp.bfloat16)
    b2 = b.astype(jnp.float32).reshape(1, N)

    pad_m = (-M0) % 8
    if pad_m:
        x = jnp.pad(x, ((0, pad_m), (0, 0)))
    M = x.shape[0]

    tm = _choose_tm(M)
    tn = _choose_tn(N, max_tn)
    vmem_limit, per_buf_cap = _vmem_budget()
    out_el = jnp.dtype(out_dtype).itemsize
    fixed = (tm * K * 2                 # single-buffered x row tile (bf16)
             + tm * tn * 4              # f32 accumulator scratch
             + 2 * tm * tn * out_el     # double-buffered output tile
             + 2 * tn * 4)              # bias tile
    tk = _choose_tk(K, tn, max_tk, vmem_limit, fixed, per_buf_cap)

    grid = (M // tm, N // tn, K // tk)
    kernel = functools.partial(_linear_kernel, activation=activation,
                               tk=tk, k_align=_align_hint(tk))
    cost = pl.CostEstimate(
        flops=2 * M * K * N,
        transcendentals=(M * N) if activation == "sigmoid" else 0,
        bytes_accessed=(M * K + K * N) * 2 + N * 4 + M * N * out_el)

    def build(single_buffer_x):
        return pl.pallas_call(
            kernel,
            out_shape=jax.ShapeDtypeStruct((M, N), out_dtype),
            grid_spec=pltpu.PrefetchScalarGridSpec(
                num_scalar_prefetch=0,
                grid=grid,
                in_specs=[
                    # x row-tile resident across j and k (block index constant).
                    _x_spec((tm, K), lambda i, j, k: (i, 0), single_buffer_x),
                    pl.BlockSpec((tk, tn), lambda i, j, k: (k, j)),
                    pl.BlockSpec((1, tn), lambda i, j, k: (0, j)),
                ],
                out_specs=pl.BlockSpec((tm, tn), lambda i, j, k: (i, j)),
                scratch_shapes=[pltpu.VMEM((tm, tn), jnp.float32)],
            ),
            compiler_params=pltpu.CompilerParams(
                dimension_semantics=("parallel", "parallel", "arbitrary"),
                vmem_limit_bytes=vmem_limit,
            ),
            cost_estimate=cost,
        )

    try:
        out = build(True)(x, w, b2)
    except Exception:
        # Fallback if single-buffered x (pl.Buffered(1)) is rejected by this build.
        out = build(False)(x, w, b2)
    return out[:M0]


def fused_linear_relu_linear_pallas(h, w2, b2, w3, b3, *, final_activation=None,
                                    max_tn=2048, max_tk=4096):
    """y = act(relu(h @ w2 + b2) @ w3 + b3); hidden tile stays in VMEM.

    Requires w3.shape[1] <= _CPAD; w3 is zero-padded to _CPAD lanes (lane-dense MXU)."""
    M0, K = h.shape
    Kw, N = w2.shape
    Nw, C = w3.shape
    assert K == Kw and N == Nw and b2.shape == (N,) and b3.shape == (C,)
    assert C <= _CPAD

    h = h if h.dtype == jnp.bfloat16 else h.astype(jnp.bfloat16)
    w2 = w2 if w2.dtype == jnp.bfloat16 else w2.astype(jnp.bfloat16)
    w3 = w3 if w3.dtype == jnp.bfloat16 else w3.astype(jnp.bfloat16)
    b2_2d = b2.astype(jnp.float32).reshape(1, N)
    w3p = jnp.pad(w3, ((0, 0), (0, _CPAD - C)))      # tiny (<= ~1 MiB bf16)

    pad_m = (-M0) % 8
    if pad_m:
        h = jnp.pad(h, ((0, pad_m), (0, 0)))
    M = h.shape[0]

    tm = _choose_tm(M)
    tn = _choose_tn(N, max_tn)
    vmem_limit, per_buf_cap = _vmem_budget()
    fixed = (tm * K * 2                 # single-buffered h row tile (bf16)
             + tm * tn * 4              # f32 accumulator scratch
             + 2 * tn * _CPAD * 2       # double-buffered w3 tile (bf16)
             + 2 * tm * _CPAD * 4       # double-buffered partial-y tile (f32)
             + 2 * tn * 4)              # bias tile
    tk = _choose_tk(K, tn, max_tk, vmem_limit, fixed, per_buf_cap)

    n_i, n_j, n_k = M // tm, N // tn, K // tk
    kernel = functools.partial(_fused_l23_kernel, tk=tk, k_align=_align_hint(tk))
    cost = pl.CostEstimate(
        flops=2 * M * K * N + 2 * M * N * _CPAD,
        transcendentals=0,
        bytes_accessed=(M * K + K * N + N * _CPAD) * 2 + N * 4 + n_j * M * _CPAD * 4)

    def build(single_buffer_x):
        return pl.pallas_call(
            kernel,
            out_shape=jax.ShapeDtypeStruct((n_j, M, _CPAD), jnp.float32),
            grid_spec=pltpu.PrefetchScalarGridSpec(
                num_scalar_prefetch=0,
                grid=(n_i, n_j, n_k),
                in_specs=[
                    _x_spec((tm, K), lambda i, j, k: (i, 0), single_buffer_x),
                    pl.BlockSpec((tk, tn), lambda i, j, k: (k, j)),
                    pl.BlockSpec((1, tn), lambda i, j, k: (0, j)),
                    pl.BlockSpec((tn, _CPAD), lambda i, j, k: (j, 0)),
                ],
                out_specs=pl.BlockSpec((1, tm, _CPAD), lambda i, j, k: (j, i, 0)),
                scratch_shapes=[pltpu.VMEM((tm, tn), jnp.float32)],
            ),
            compiler_params=pltpu.CompilerParams(
                dimension_semantics=("parallel", "parallel", "arbitrary"),
                vmem_limit_bytes=vmem_limit,
            ),
            cost_estimate=cost,
        )

    try:
        yp = build(True)(h, w2, b2_2d, w3p)
    except Exception:
        yp = build(False)(h, w2, b2_2d, w3p)

    y = jnp.sum(yp, axis=0)[:M0, :C] + b3.astype(jnp.float32)
    if final_activation == "sigmoid":
        y = jax.nn.sigmoid(y)
    return y


# ---------------------------------------------------------------------------
# Parameters & forward
# ---------------------------------------------------------------------------
def init_fc_params(key, in_features, hidden, num_classes, dtype=jnp.float32):
    """Deterministic init mirroring nn.Linear's U(-1/sqrt(fan_in), 1/sqrt(fan_in))."""
    dims = [(in_features, hidden), (hidden, hidden), (hidden, num_classes)]
    params = []
    keys = jax.random.split(key, 2 * len(dims))
    for li, (din, dout) in enumerate(dims):
        bound = 1.0 / math.sqrt(din)
        w = jax.random.uniform(keys[2 * li], (din, dout), dtype, -bound, bound)
        b = jax.random.uniform(keys[2 * li + 1], (dout,), dtype, -bound, bound)
        params.append((w, b))
    return params


def prepare_fc_params(params):
    """One-time cast (parameter-load time): weights -> bf16, biases -> f32.

    Doing this once removes the per-forward f32->bf16 weight HBM round trip."""
    return [(w.astype(jnp.bfloat16), b.astype(jnp.float32)) for (w, b) in params]


def fc_forward_pallas(x, params, num_classes, *, max_tn=2048, max_tk=4096):
    """Inference forward of the VGG FC head; params from prepare_fc_params."""
    (w1, b1), (w2, b2), (w3, b3) = params
    h1 = linear_pallas(x, w1, b1, activation="relu",
                       max_tn=max_tn, max_tk=max_tk)       # bf16 activations out
    # Dropout(p=0.5): identity at inference.
    last_act = "sigmoid" if num_classes == 1 else None
    if w3.shape[1] <= _CPAD:
        # Fused Linear->ReLU->[Dropout]->Linear[->Sigmoid].
        return fused_linear_relu_linear_pallas(h1, w2, b2, w3, b3,
                                               final_activation=last_act,
                                               max_tn=max_tn, max_tk=max_tk)
    # Wide final layer: fall back to two separate pallas_calls.
    h2 = linear_pallas(h1, w2, b2, activation="relu", max_tn=max_tn, max_tk=max_tk)
    return linear_pallas(h2, w3, b3, activation=last_act, out_dtype=jnp.float32,
                         max_tn=max_tn, max_tk=max_tk)


# ---------------------------------------------------------------------------
# References (bf16-input / f32-accumulate semantics, matching the kernels)
# ---------------------------------------------------------------------------
def _linear_ref(x, w, b, activation=None):
    xb = x.astype(jnp.bfloat16).astype(jnp.float32)
    wb = w.astype(jnp.bfloat16).astype(jnp.float32)
    y = xb @ wb + b.astype(jnp.float32)
    if activation == "relu":
        y = jnp.maximum(y, 0.0)
    elif activation == "sigmoid":
        y = jax.nn.sigmoid(y)
    return y


def fc_forward_ref(x, params, num_classes):
    (w1, b1), (w2, b2), (w3, b3) = params
    h1 = _linear_ref(x, w1, b1, "relu").astype(jnp.bfloat16)
    h2 = _linear_ref(h1, w2, b2, "relu")
    return _linear_ref(h2, w3, b3, "sigmoid" if num_classes == 1 else None)


if __name__ == "__main__":
    # Small stand-in shapes for the VGG head (512*7*7 -> 4096 -> 4096 -> C).
    B, D_IN, D_H = 8, 1024, 512

    key = jax.random.PRNGKey(0)
    kx, kp = jax.random.split(key)
    x = jax.random.normal(kx, (B, D_IN), jnp.float32)

    # 1) Standalone linear with forced small tiles (multi-j, multi-k grid).
    params_dbg = prepare_fc_params(init_fc_params(kp, D_IN, D_H, 16))
    w1d, b1d = params_dbg[0]
    y_small = jax.block_until_ready(
        linear_pallas(x, w1d, b1d, activation="relu", max_tn=128, max_tk=256))
    y_small_ref = _linear_ref(x, w1d, b1d, activation="relu")
    assert jnp.allclose(y_small.astype(jnp.float32), y_small_ref,
                        atol=2e-2, rtol=2e-2), "standalone linear mismatch"

    # 2) Fused layer2+3 with forced small tiles (multi-j, multi-k) vs reference.
    (w2d, b2d), (w3d, b3d) = params_dbg[1], params_dbg[2]
    h_dbg = _linear_ref(x, w1d, b1d, "relu").astype(jnp.bfloat16)
    y_fused = jax.block_until_ready(
        fused_linear_relu_linear_pallas(h_dbg, w2d, b2d, w3d, b3d,
                                        max_tn=128, max_tk=128))
    y_fused_ref = _linear_ref(_linear_ref(h_dbg, w2d, b2d, "relu"), w3d, b3d)
    assert jnp.allclose(y_fused, y_fused_ref, atol=2e-2, rtol=2e-2), "fused mismatch"

    # 3) Full FC head, sigmoid (num_classes=1) and plain branches;
    #    weights pre-cast to bf16 ONCE (no per-forward convert traffic).
    for num_classes in (1, 16):
        params = prepare_fc_params(init_fc_params(kp, D_IN, D_H, num_classes))
        y = jax.block_until_ready(fc_forward_pallas(x, params, num_classes))
        y_ref = fc_forward_ref(x, params, num_classes)
        assert y.shape == (B, num_classes)
        assert jnp.allclose(y.astype(jnp.float32), y_ref, atol=2e-2, rtol=2e-2), (
            f"mismatch for num_classes={num_classes}")

    print("KERNEL_OK")
</pallas_src>

<mosaic_0001>
module attributes {stable_mosaic.version = 11 : i64} {
  func.func @_linear_kernel(%arg0: i32, %arg1: i32, %arg2: i32, %arg3: memref<8x1024xbf16, #tpu.memory_space<vmem>>, %arg4: memref<256x128xbf16, #tpu.memory_space<vmem>>, %arg5: memref<1x128xf32, #tpu.memory_space<vmem>>, %arg6: memref<8x128xbf16, #tpu.memory_space<vmem>>, %arg7: memref<8x128xf32, #tpu.memory_space<vmem>>) attributes {dimension_semantics = [#tpu.dimension_semantics<parallel>, #tpu.dimension_semantics<parallel>, #tpu.dimension_semantics<arbitrary>], iteration_bounds = array<i64: 1, 4, 4>, scalar_prefetch = 0 : i64, scratch_operands = 1 : i64, tpu.core_type = #tpu.core_type<tc>, window_params = [{pipeline_mode = #tpu.pipeline_mode<synchronous>, transform_indices = @transform_0, window_bounds = array<i64: 8, 1024>}, {transform_indices = @transform_1, window_bounds = array<i64: 256, 128>}, {transform_indices = @transform_2, window_bounds = array<i64: 1, 128>}, {transform_indices = @transform_3, window_bounds = array<i64: 8, 128>}]} {
    %c0_i32 = arith.constant 0 : i32
    %0 = arith.cmpi eq, %arg2, %c0_i32 : i32
    %1 = arith.extui %0 : i1 to i32
    %c0_i32_0 = arith.constant 0 : i32
    %2 = arith.cmpi ne, %1, %c0_i32_0 : i32
    scf.if %2 {
      %cst_8 = arith.constant 0.000000e+00 : f32
      %15 = vector.broadcast %cst_8 : f32 to vector<8x128xf32>
      %c0_9 = arith.constant 0 : index
      %c0_10 = arith.constant 0 : index
      %16 = vector.load %arg7[%c0_9, %c0_10] : memref<8x128xf32, #tpu.memory_space<vmem>>, vector<8x128xf32>
      tpu.vector_store %arg7[%c0_9, %c0_10], %15 {strides = array<i32>} : memref<8x128xf32, #tpu.memory_space<vmem>>, vector<8x128xf32>,
    } else {
    }
    %c256_i32 = arith.constant 256 : i32
    %3 = arith.muli %arg2, %c256_i32 : i32
    %4 = tpu.assume_multiple %3, 256 : i32
    %c0 = arith.constant 0 : index
    %c0_1 = arith.constant 0 : index
    %5 = vector.load %arg7[%c0, %c0_1] : memref<8x128xf32, #tpu.memory_space<vmem>>, vector<8x128xf32>
    %c0_2 = arith.constant 0 : index
    %6 = arith.index_cast %4 : i32 to index
    %7 = vector.load %arg3[%c0_2, %6] : memref<8x1024xbf16, #tpu.memory_space<vmem>>, vector<8x256xbf16>
    %c0_3 = arith.constant 0 : index
    %c0_4 = arith.constant 0 : index
    %8 = vector.load %arg4[%c0_3, %c0_4] : memref<256x128xbf16, #tpu.memory_space<vmem>>, vector<256x128xbf16>
    %cst = arith.constant dense<0.000000e+00> : vector<8x128xf32>
    %9 = tpu.matmul %7, %8, %cst {dimension_numbers = #tpu.dot_dimension_numbers<[1], [0], [0], [1], [0, 0, 1, 1], [], []>} : vector<8x256xbf16>, vector<256x128xbf16>, vector<8x128xf32> -> vector<8x128xf32>
    %10 = arith.addf %5, %9 : vector<8x128xf32>
    %c0_5 = arith.constant 0 : index
    %c0_6 = arith.constant 0 : index
    %11 = vector.load %arg7[%c0_5, %c0_6] : memref<8x128xf32, #tpu.memory_space<vmem>>, vector<8x128xf32>
    tpu.vector_store %arg7[%c0_5, %c0_6], %10 {strides = array<i32>} : memref<8x128xf32, #tpu.memory_space<vmem>>, vector<8x128xf32>,
    %c3_i32 = arith.constant 3 : i32
    %12 = arith.cmpi eq, %arg2, %c3_i32 : i32
    %13 = arith.extui %12 : i1 to i32
    %c0_i32_7 = arith.constant 0 : i32
    %14 = arith.cmpi ne, %13, %c0_i32_7 : i32
    scf.if %14 {
      %c0_8 = arith.constant 0 : index
      %c0_9 = arith.constant 0 : index
      %15 = vector.load %arg7[%c0_8, %c0_9] : memref<8x128xf32, #tpu.memory_space<vmem>>, vector<8x128xf32>
      %c0_10 = arith.constant 0 : index
      %c0_11 = arith.constant 0 : index
      %16 = vector.load %arg5[%c0_10, %c0_11] : memref<1x128xf32, #tpu.memory_space<vmem>>, vector<1x128xf32>
      %17 = vector.broadcast %16 : vector<1x128xf32> to vector<8x128xf32>
      %18 = arith.addf %15, %17 : vector<8x128xf32>
      %cst_12 = arith.constant 0.000000e+00 : f32
      %19 = vector.broadcast %cst_12 : f32 to vector<8x128xf32>
      %20 = arith.maximumf %18, %19 : vector<8x128xf32>
      %21 = arith.truncf %20 : vector<8x128xf32> to vector<8x128xbf16>
      %c0_13 = arith.constant 0 : index
      %c0_14 = arith.constant 0 : index
      %22 = vector.load %arg6[%c0_13, %c0_14] : memref<8x128xbf16, #tpu.memory_space<vmem>>, vector<8x128xbf16>
      tpu.vector_store %arg6[%c0_13, %c0_14], %21 {strides = array<i32>} : memref<8x128xbf16, #tpu.memory_space<vmem>>, vector<8x128xbf16>,
    } else {
    }
    return
  }
  func.func @transform_0(%arg0: i32, %arg1: i32, %arg2: i32) -> (i32, i32) {
    %c0_i32 = arith.constant 0 : i32
    %c0_i32_0 = arith.constant 0 : i32
    return %arg0, %c0_i32 : i32, i32
  }
  func.func @transform_1(%arg0: i32, %arg1: i32, %arg2: i32) -> (i32, i32) {
    %c0_i32 = arith.constant 0 : i32
    return %arg2, %arg1 : i32, i32
  }
  func.func @transform_2(%arg0: i32, %arg1: i32, %arg2: i32) -> (i32, i32) {
    %c0_i32 = arith.constant 0 : i32
    %c0_i32_0 = arith.constant 0 : i32
    return %c0_i32, %arg1 : i32, i32
  }
  func.func @transform_3(%arg0: i32, %arg1: i32, %arg2: i32) -> (i32, i32) {
    %c0_i32 = arith.constant 0 : i32
    return %arg0, %arg1 : i32, i32
  }
}

module attributes {stable_mosaic.version = 11 : i64} {
  func.func @_linear_kernel(%arg0: i32, %arg1: i32, %arg2: i32, %arg3: memref<8x1024xbf16, #tpu.memory_space<vmem>>, %arg4: memref<256x128xbf16, #tpu.memory_space<vmem>>, %arg5: memref<1x128xf32, #tpu.memory_space<vmem>>, %arg6: memref<8x128xbf16, #tpu.memory_space<vmem>>, %arg7: memref<8x128xf32, #tpu.memory_space<vmem>>) attributes {dimension_semantics = [#tpu.dimension_semantics<parallel>, #tpu.dimension_semantics<parallel>, #tpu.dimension_semantics<arbitrary>], iteration_bounds = array<i64: 1, 4, 4>, scalar_prefetch = 0 : i64, scratch_operands = 1 : i64, tpu.core_type = #tpu.core_type<tc>, window_params = [{transform_indices = @transform_0, window_bounds = array<i64: 8, 1024>}, {transform_indices = @transform_1, window_bounds = array<i64: 256, 128>}, {transform_indices = @transform_2, window_bounds = array<i64: 1, 128>}, {transform_indices = @transform_3, window_bounds = array<i64: 8, 128>}]} {
    %c0_i32 = arith.constant 0 : i32
    %0 = arith.cmpi eq, %arg2, %c0_i32 : i32
    %1 = arith.extui %0 : i1 to i32
    %c0_i32_0 = arith.constant 0 : i32
    %2 = arith.cmpi ne, %1, %c0_i32_0 : i32
    scf.if %2 {
      %cst_8 = arith.constant 0.000000e+00 : f32
      %15 = vector.broadcast %cst_8 : f32 to vector<8x128xf32>
      %c0_9 = arith.constant 0 : index
      %c0_10 = arith.constant 0 : index
      %16 = vector.load %arg7[%c0_9, %c0_10] : memref<8x128xf32, #tpu.memory_space<vmem>>, vector<8x128xf32>
      tpu.vector_store %arg7[%c0_9, %c0_10], %15 {strides = array<i32>} : memref<8x128xf32, #tpu.memory_space<vmem>>, vector<8x128xf32>,
    } else {
    }
    %c256_i32 = arith.constant 256 : i32
    %3 = arith.muli %arg2, %c256_i32 : i32
    %4 = tpu.assume_multiple %3, 256 : i32
    %c0 = arith.constant 0 : index
    %c0_1 = arith.constant 0 : index
    %5 = vector.load %arg7[%c0, %c0_1] : memref<8x128xf32, #tpu.memory_space<vmem>>, vector<8x128xf32>
    %c0_2 = arith.constant 0 : index
    %6 = arith.index_cast %4 : i32 to index
    %7 = vector.load %arg3[%c0_2, %6] : memref<8x1024xbf16, #tpu.memory_space<vmem>>, vector<8x256xbf16>
    %c0_3 = arith.constant 0 : index
    %c0_4 = arith.constant 0 : index
    %8 = vector.load %arg4[%c0_3, %c0_4] : memref<256x128xbf16, #tpu.memory_space<vmem>>, vector<256x128xbf16>
    %cst = arith.constant dense<0.000000e+00> : vector<8x128xf32>
    %9 = tpu.matmul %7, %8, %cst {dimension_numbers = #tpu.dot_dimension_numbers<[1], [0], [0], [1], [0, 0, 1, 1], [], []>} : vector<8x256xbf16>, vector<256x128xbf16>, vector<8x128xf32> -> vector<8x128xf32>
    %10 = arith.addf %5, %9 : vector<8x128xf32>
    %c0_5 = arith.constant 0 : index
    %c0_6 = arith.constant 0 : index
    %11 = vector.load %arg7[%c0_5, %c0_6] : memref<8x128xf32, #tpu.memory_space<vmem>>, vector<8x128xf32>
    tpu.vector_store %arg7[%c0_5, %c0_6], %10 {strides = array<i32>} : memref<8x128xf32, #tpu.memory_space<vmem>>, vector<8x128xf32>,
    %c3_i32 = arith.constant 3 : i32
    %12 = arith.cmpi eq, %arg2, %c3_i32 : i32
    %13 = arith.extui %12 : i1 to i32
    %c0_i32_7 = arith.constant 0 : i32
    %14 = arith.cmpi ne, %13, %c0_i32_7 : i32
    scf.if %14 {
      %c0_8 = arith.constant 0 : index
      %c0_9 = arith.constant 0 : index
      %15 = vector.load %arg7[%c0_8, %c0_9] : memref<8x128xf32, #tpu.memory_space<vmem>>, vector<8x128xf32>
      %c0_10 = arith.constant 0 : index
      %c0_11 = arith.constant 0 : index
      %16 = vector.load %arg5[%c0_10, %c0_11] : memref<1x128xf32, #tpu.memory_space<vmem>>, vector<1x128xf32>
      %17 = vector.broadcast %16 : vector<1x128xf32> to vector<8x128xf32>
      %18 = arith.addf %15, %17 : vector<8x128xf32>
      %cst_12 = arith.constant 0.000000e+00 : f32
      %19 = vector.broadcast %cst_12 : f32 to vector<8x128xf32>
      %20 = arith.maximumf %18, %19 : vector<8x128xf32>
      %21 = arith.truncf %20 : vector<8x128xf32> to vector<8x128xbf16>
      %c0_13 = arith.constant 0 : index
      %c0_14 = arith.constant 0 : index
      %22 = vector.load %arg6[%c0_13, %c0_14] : memref<8x128xbf16, #tpu.memory_space<vmem>>, vector<8x128xbf16>
      tpu.vector_store %arg6[%c0_13, %c0_14], %21 {strides = array<i32>} : memref<8x128xbf16, #tpu.memory_space<vmem>>, vector<8x128xbf16>,
    } else {
    }
    return
  }
  func.func @transform_0(%arg0: i32, %arg1: i32, %arg2: i32) -> (i32, i32) {
    %c0_i32 = arith.constant 0 : i32
    %c0_i32_0 = arith.constant 0 : i32
    return %arg0, %c0_i32 : i32, i32
  }
  func.func @transform_1(%arg0: i32, %arg1: i32, %arg2: i32) -> (i32, i32) {
    %c0_i32 = arith.constant 0 : i32
    return %arg2, %arg1 : i32, i32
  }
  func.func @transform_2(%arg0: i32, %arg1: i32, %arg2: i32) -> (i32, i32) {
    %c0_i32 = arith.constant 0 : i32
    %c0_i32_0 = arith.constant 0 : i32
    return %c0_i32, %arg1 : i32, i32
  }
  func.func @transform_3(%arg0: i32, %arg1: i32, %arg2: i32) -> (i32, i32) {
    %c0_i32 = arith.constant 0 : i32
    return %arg0, %arg1 : i32, i32
  }
}

</mosaic_0001>

<llo_original>
// kernel: tpu_custom_call.1
$region0: #{tpu_custom_call.1}
  #allocation0 [shape = 'u32[]', space=smem, size = 0x4, offset = 0x4, fixed_abs, tag = 'smem constant byte address 0x4 - core index']
  #allocation1 [shape = 'u32[144,128]{1,0:T(1,128)}', space=vmem, size = 0x12000, scoped, tag = 'internal scratch']
  #allocation2 [shape = 'f32[8,128]{1,0:T(8,128)}', space=vmem, size = 0x1000, scoped, tag = 'scratch operand']
  %s0 = inlined_call_operand.hbm [shape: bf16[8,1024], index: 0, kind: input, shape index: {}]
  %s1 = inlined_call_operand.hbm [shape: bf16[1024,512], index: 1, kind: input, shape index: {}]
  %s2 = inlined_call_operand.vmem [shape: f32[1,512], index: 2, kind: input, shape index: {}]
  %s3 = inlined_call_operand.hbm [shape: bf16[8,512], index: 3, kind: output, shape index: {}]
  %s4 = sld [smem:[#allocation0]]
  $region61: #{tpu_custom_call.1} parent=0
    _
  %s6 = ssub.s32 1, %s4
  %s7 = scalar_select 0, %s6, %s4
  $region1: #{tpu_custom_call.1} parent=0
    #allocation3 [shape = 'u8[16384]{0}', space=vmem, size = 0x4000, scoped, tag = 'input window, operand 0, single buffered']
    #allocation4 [shape = 's32[2]{0}', space=sflag, size = 0x8, scoped, tag = 'scoped memory for tpu_custom_call.1']
    #allocation5 [shape = 's32[2]{0}', space=sflag, size = 0x8, scoped, tag = 'scoped memory for tpu_custom_call.1']
    #allocation6 [shape = 'u8[131072]{0}', space=vmem, size = 0x20000, scoped, tag = 'input window, operand 1']
    #allocation7 [shape = 's32[2]{0}', space=sflag, size = 0x8, scoped, tag = 'scoped memory for tpu_custom_call.1']
    #allocation8 [shape = 'u8[4096]{0}', space=vmem, size = 0x1000, scoped, tag = 'output window, operand 0']
    %8 = vsyncpa [#allocation4], 0
    %9 = vsyncpa [#allocation7], 0
    %s10 = scalar_lea.sflag [#allocation7], 1
    %11 = vsyncpa %s10, 0
    %12 = vsyncpa [#allocation5], 0
    %s13 = scalar_lea.sflag [#allocation5], 1
    %14 = vsyncpa %s13, 0
    loop: start=0, step=1, limit=18
    $region2: #{tpu_custom_call.1} parent=1 // loop_pre_header
      _
    $region3: #{tpu_custom_call.1} parent=1 // loop_header
      %s16 = sphi 0, %s20
      %p17 = scmp.ge.s32.totalorder %s16, 18
      %s23 = sphi 0, %s42
      %s24 = sphi 0, %s38
      %s25 = sphi 0, %s34
      %s26 = sphi 0, %s23
      %s27 = sphi 0, %s24
      %s28 = sphi 0, %s25
      %s29 = sphi 0, %s26
      %s30 = sphi 0, %s27
      %s31 = sphi 0, %s28
      %s45 = sphi 0, %s47
      %s48 = sphi 0, %s45
      %s49 = sphi 0, %s48
      %s65 = sphi 0, %s49
      %s73 = sphi 0, %s75
      %s76 = sphi 0, %s73
      %s77 = sphi 0, %s76
      %s93 = sphi 0, %s77
      %s99 = sphi 0, %s101
      %s102 = sphi 0, %s99
      %s103 = sphi 0, %s102
      %s119 = sphi 0, %s103
      %s127 = sphi 0, %s129
      %s130 = sphi 0, %s127
      %s131 = sphi 0, %s130
      %s147 = sphi 0, %s131
    $region4: #{tpu_custom_call.1} parent=1 // loop_header_branch
      %19 = sbr.rel (%p17) target = $region8
    $region5: #{tpu_custom_call.1} parent=1 // loop_body
      %s21 = ssub.s32 %s16, 1
      %s22 = ssub.s32 %s16, 2
      %s32 = sadd.s32 1, %s25
      %p33 = scmp.ge.s32.totalorder %s32, 4
      %s34 = scalar_select %p33, 0, %s32
      %s35 = sadd.s32 1, %s24
      %s36 = scalar_select %p33, %s35, %s24
      %p37 = scmp.ge.s32.totalorder %s36, 4
      %s38 = scalar_select %p37, 0, %s36
      %s39 = sadd.s32 1, %s23
      %s40 = scalar_select %p37, %s39, %s23
      %p41 = scmp.ge.s32.totalorder %s40, 1
      %s42 = scalar_select %p41, 0, %s40
      %s43 = ssub.s32 %s23, %s42
      %p44 = scmp.eq.s32.totalorder %s43, 0
      %s46 = sadd.s32 %s45, 1
      %s47 = scalar_select %p44, %s45, %s46
      %p50 = pneg %p44
      %p51 = scmp.eq.s32.totalorder %s16, 15
      %p52 = por %p50, %p51
      %p53 = scmp.ne.s32.totalorder %s45, %s48
      %p54 = scmp.eq.s32.totalorder %s16, 0
      %p55 = por %p53, %p54
      %p56 = scmp.ne.s32.totalorder %s45, %s48
      %p57 = scmp.eq.s32.totalorder %s21, 15
      %p58 = por %p56, %p57
      %p59 = scmp.ne.s32.totalorder %s48, %s49
      %p60 = scmp.eq.s32.totalorder %s21, 0
      %p61 = por %p59, %p60
      %p62 = scmp.ne.s32.totalorder %s48, %s49
      %p63 = scmp.eq.s32.totalorder %s22, 15
      %p64 = por %p62, %p63
      %p66 = scmp.ne.s32.totalorder %s49, %s65
      %p67 = scmp.eq.s32.totalorder %s22, 0
      %p68 = por %p66, %p67
      %s69 = ssub.s32 %s25, %s34
      %s70 = ssub.s32 %s24, %s38
      %s71 = sor.u32 %s69, %s70
      %p72 = scmp.eq.s32.totalorder %s71, 0
      %s74 = sadd.s32 %s73, 1
      %s75 = scalar_select %p72, %s73, %s74
      %p78 = pneg %p72
      %p79 = scmp.eq.s32.totalorder %s16, 15
      %p80 = por %p78, %p79
      %p81 = scmp.ne.s32.totalorder %s73, %s76
      %p82 = scmp.eq.s32.totalorder %s16, 0
      %p83 = por %p81, %p82
      %p84 = scmp.ne.s32.totalorder %s73, %s76
      %p85 = scmp.eq.s32.totalorder %s21, 15
      %p86 = por %p84, %p85
      %p87 = scmp.ne.s32.totalorder %s76, %s77
      %p88 = scmp.eq.s32.totalorder %s21, 0
      %p89 = por %p87, %p88
      %p90 = scmp.ne.s32.totalorder %s76, %s77
      %p91 = scmp.eq.s32.totalorder %s22, 15
      %p92 = por %p90, %p91
      %p94 = scmp.ne.s32.totalorder %s77, %s93
      %p95 = scmp.eq.s32.totalorder %s22, 0
      %p96 = por %p94, %p95
      %s97 = ssub.s32 %s24, %s38
      %p98 = scmp.eq.s32.totalorder %s97, 0
      %s100 = sadd.s32 %s99, 1
      %s101 = scalar_select %p98, %s99, %s100
      %p104 = pneg %p98
      %p105 = scmp.eq.s32.totalorder %s16, 15
      %p106 = por %p104, %p105
      %p107 = scmp.ne.s32.totalorder %s99, %s102
      %p108 = scmp.eq.s32.totalorder %s16, 0
      %p109 = por %p107, %p108
      %p110 = scmp.ne.s32.totalorder %s99, %s102
      %p111 = scmp.eq.s32.totalorder %s21, 15
      %p112 = por %p110, %p111
      %p113 = scmp.ne.s32.totalorder %s102, %s103
      %p114 = scmp.eq.s32.totalorder %s21, 0
      %p115 = por %p113, %p114
      %p116 = scmp.ne.s32.totalorder %s102, %s103
      %p117 = scmp.eq.s32.totalorder %s22, 15
      %p118 = por %p116, %p117
      %p120 = scmp.ne.s32.totalorder %s103, %s119
      %p121 = scmp.eq.s32.totalorder %s22, 0
      %p122 = por %p120, %p121
      %s123 = ssub.s32 %s23, %s42
      %s124 = ssub.s32 %s24, %s38
      %s125 = sor.u32 %s123, %s124
      %p126 = scmp.eq.s32.totalorder %s125, 0
      %s128 = sadd.s32 %s127, 1
      %s129 = scalar_select %p126, %s127, %s128
      %p132 = pneg %p126
      %p133 = scmp.eq.s32.totalorder %s16, 15
      %p134 = por %p132, %p133
      %p135 = scmp.ne.s32.totalorder %s127, %s130
      %p136 = scmp.eq.s32.totalorder %s16, 0
      %p137 = por %p135, %p136
      %p138 = scmp.ne.s32.totalorder %s127, %s130
      %p139 = scmp.eq.s32.totalorder %s21, 15
      %p140 = por %p138, %p139
      %p141 = scmp.ne.s32.totalorder %s130, %s131
      %p142 = scmp.eq.s32.totalorder %s21, 0
      %p143 = por %p141, %p142
      %p144 = scmp.ne.s32.totalorder %s130, %s131
      %p145 = scmp.eq.s32.totalorder %s22, 15
      %p146 = por %p144, %p145
      %p148 = scmp.ne.s32.totalorder %s131, %s147
      %p149 = scmp.eq.s32.totalorder %s22, 0
      %p150 = por %p148, %p149
      %p151 = scmp.le.s32.totalorder 1, %s16
      %p152 = scmp.lt.s32.totalorder %s16, 17
      %p153 = pnand %p151, %p152
      %p154 = pneg %p153
      // Predicated region
      $region9: #{tpu_custom_call.1} parent=5 // pred_check
        _
      $region10: #{tpu_custom_call.1} parent=5 // pred_check_branch
        %156 = sbr.rel (%p153) target = $region12
      $region11: #{tpu_custom_call.1} parent=5 // pred_region
        %s157 = ssub.s32 %s16, 1
        // Predicated region
        $region13: #{tpu_custom_call.1} parent=11 // pred_check
          %p158 = pneg %p61
        $region14: #{tpu_custom_call.1} parent=11 // pred_check_branch
          %160 = sbr.rel (%p158) target = $region16
        $region15: #{tpu_custom_call.1} parent=11 // pred_region
          %s162 = ssub.s32 512, 512
          %163 = vsyncadd [#allocation4], %s162
          %s164 = smul.addr %s26, 8
          %s165 = smul.addr %s164, 64
          %s166 = scalar_lea.hbm %s0, %s165
          %s168 = sshll.u32 [#allocation3], 4
          %s169 = int_to_ptr.vmem [resolvable:$true] %s168
          %171 = dma.hbm_to_vmem [thread:$0]  %s166, 512, %s169, [#allocation4]
        $region16: #{tpu_custom_call.1} parent=11 // pred_fallthru
          _
      $region12: #{tpu_custom_call.1} parent=5 // pred_fallthru
        _
      %p172 = scmp.lt.s32.totalorder %s16, 16
      // Predicated region
      $region17: #{tpu_custom_call.1} parent=5 // pred_check
        %p173 = pneg %p172
      $region18: #{tpu_custom_call.1} parent=5 // pred_check_branch
        %175 = sbr.rel (%p173) target = $region20
      $region19: #{tpu_custom_call.1} parent=5 // pred_region
        // Predicated region
        $region21: #{tpu_custom_call.1} parent=19 // pred_check
          %p176 = pneg %p83
        $region22: #{tpu_custom_call.1} parent=19 // pred_check_branch
          %178 = sbr.rel (%p176) target = $region24
        $region23: #{tpu_custom_call.1} parent=19 // pred_region
          %s179 = sand.u32 %s73, 1
          %s180 = scalar_lea.sflag [#allocation7], %s179
          %s181 = sand.u32 %s73, 1
          %s182 = smul.addr %s181, 128
          %s183 = scalar_lea.vmem [#allocation6], %s182
          %s184 = smul.u32 32, %s25
          %s186 = ssub.s32 2048, 2048
          %187 = vsyncadd %s180, %s186
          %s188 = smul.addr %s184, 4
          %s189 = sadd.s32 %s24, %s188
          %s190 = smul.addr %s189, 64
          %s191 = scalar_lea.hbm %s1, %s190
          %s192 = sshll.u32 %s183, 4
          %s193 = int_to_ptr.vmem [resolvable:$true] %s192
          %198 = dma.hbm_to_vmem [thread:$0]  %s191, 2048, %s193, %s180, 256, 64, 4
        $region24: #{tpu_custom_call.1} parent=19 // pred_fallthru
          _
        // Predicated region
        $region25: #{tpu_custom_call.1} parent=19 // pred_check
          %p199 = pneg %p109
        $region26: #{tpu_custom_call.1} parent=19 // pred_check_branch
          %201 = sbr.rel (%p199) target = $region28
        $region27: #{tpu_custom_call.1} parent=19 // pred_region
          %p202 = scmp.lt.s32.totalorder %s24, 3
          %s203 = scalar_select %p202, %s24, 3
          %s204 = scalar_lea.vmem %s2, %s203
        $region28: #{tpu_custom_call.1} parent=19 // pred_fallthru
          _
      $region20: #{tpu_custom_call.1} parent=5 // pred_fallthru
        _
      %p205 = scmp.le.s32.totalorder 1, %s16
      %p206 = scmp.lt.s32.totalorder %s16, 17
      %p207 = pnand %p205, %p206
      %p208 = pneg %p207
      // Predicated region
      $region29: #{tpu_custom_call.1} parent=5 // pred_check
        _
      $region30: #{tpu_custom_call.1} parent=5 // pred_check_branch
        %210 = sbr.rel (%p207) target = $region32
      $region31: #{tpu_custom_call.1} parent=5 // pred_region
        %s211 = ssub.s32 %s16, 1
        // Predicated region
        $region33: #{tpu_custom_call.1} parent=31 // pred_check
          %p212 = pneg %p61
        $region34: #{tpu_custom_call.1} parent=31 // pred_check_branch
          %214 = sbr.rel (%p212) target = $region36
        $region35: #{tpu_custom_call.1} parent=31 // pred_region
          %215 = dma.done [#allocation4], 512
        $region36: #{tpu_custom_call.1} parent=31 // pred_fallthru
          _
        %s216 = sand.u32 %s76, 1
        %s217 = scalar_lea.sflag [#allocation7], %s216
        %s218 = sand.u32 %s76, 1
        %s219 = smul.addr %s218, 128
        %s220 = scalar_lea.vmem [#allocation6], %s219
        // Predicated region
        $region37: #{tpu_custom_call.1} parent=31 // pred_check
          %p221 = pneg %p89
        $region38: #{tpu_custom_call.1} parent=31 // pred_check_branch
          %223 = sbr.rel (%p221) target = $region40
        $region39: #{tpu_custom_call.1} parent=31 // pred_region
          %224 = dma.done %s217, 2048
        $region40: #{tpu_custom_call.1} parent=31 // pred_fallthru
          _
        %p225 = pneg %p61
        %p226 = pneg %p58
        %s227 = sand.u32 %s76, 1
        %s228 = scalar_lea.sflag [#allocation7], %s227
        %s229 = sand.u32 %s76, 1
        %s230 = smul.addr %s229, 128
        %s231 = scalar_lea.vmem [#allocation6], %s230
        %p232 = pneg %p89
        %p233 = pneg %p86
        %p234 = scmp.lt.s32.totalorder %s27, 3
        %s235 = scalar_select %p234, %s27, 3
        %s236 = scalar_lea.vmem %s2, %s235
        %p237 = pneg %p115
        %p238 = pneg %p112
        %p239 = pneg %p143
        %p240 = pneg %p140
        %s241 = sand.u32 %s130, 1
        %s242 = scalar_lea.sflag [#allocation5], %s241
        %s243 = sand.u32 %s130, 1
        %s244 = smul.addr %s243, 4
        %s245 = scalar_lea.vmem [#allocation8], %s244
        %s246 = smul.u32 32, %s28
        %p247 = scmp.lt.s32.totalorder %s27, 3
        %s248 = scalar_select %p247, %s27, 3
        %s249 = scalar_lea.vmem %s2, %s248
        %p251 = scmp.eq.s32.totalorder %s28, 0
        // Predicated region
        $region41: #{tpu_custom_call.1} parent=31 // pred_check
          %p252 = pneg %p251
        $region42: #{tpu_custom_call.1} parent=31 // pred_check_branch
          %254 = sbr.rel (%p252) target = $region44
        $region43: #{tpu_custom_call.1} parent=31 // pred_region
          %255 = vst [vmem:[#allocation2] sm:$0xff] 0.0
        $region44: #{tpu_custom_call.1} parent=31 // pred_fallthru
          _
        %s256 = smul.u32 %s28, 256
        %v257 = vld [vmem:[#allocation2] sm:$0xff]
        %s258 = sshra.s32 %s256, 7
        %s259 = sand.u32 %s256, 127
        %s260 = smul.addr %s258, 4
        %s261 = scalar_lea.vmem [#allocation3], %s260
        %v262 = vld [vmem:[%s261] sm:$0xff]
        %v263 = vld [vmem:[%s220] sm:$0xf]
        %v264 = vld [vmem:[%s220 + $0x4] sm:$0xf]
        %v265 = vld [vmem:[%s220 + $0x8] sm:$0xf]
        %v266 = vld [vmem:[%s220 + $0xc] sm:$0xf]
        %v267 = vld [vmem:[%s220 + $0x10] sm:$0xf]
        %v268 = vld [vmem:[%s220 + $0x14] sm:$0xf]
        %v269 = vld [vmem:[%s220 + $0x18] sm:$0xf]
        %v270 = vld [vmem:[%s220 + $0x1c] sm:$0xf]
        %v271 = vld [vmem:[%s220 + $0x20] sm:$0xf]
        %v272 = vld [vmem:[%s220 + $0x24] sm:$0xf]
        %v273 = vld [vmem:[%s220 + $0x28] sm:$0xf]
        %v274 = vld [vmem:[%s220 + $0x2c] sm:$0xf]
        %v275 = vld [vmem:[%s220 + $0x30] sm:$0xf]
        %v276 = vld [vmem:[%s220 + $0x34] sm:$0xf]
        %v277 = vld [vmem:[%s220 + $0x38] sm:$0xf]
        %v278 = vld [vmem:[%s220 + $0x3c] sm:$0xf]
        %v279 = vld [vmem:[%s220 + $0x40] sm:$0xf]
        %v280 = vld [vmem:[%s220 + $0x44] sm:$0xf]
        %v281 = vld [vmem:[%s220 + $0x48] sm:$0xf]
        %v282 = vld [vmem:[%s220 + $0x4c] sm:$0xf]
        %v283 = vld [vmem:[%s220 + $0x50] sm:$0xf]
        %v284 = vld [vmem:[%s220 + $0x54] sm:$0xf]
        %v285 = vld [vmem:[%s220 + $0x58] sm:$0xf]
        %v286 = vld [vmem:[%s220 + $0x5c] sm:$0xf]
        %v287 = vld [vmem:[%s220 + $0x60] sm:$0xf]
        %v288 = vld [vmem:[%s220 + $0x64] sm:$0xf]
        %v289 = vld [vmem:[%s220 + $0x68] sm:$0xf]
        %v290 = vld [vmem:[%s220 + $0x6c] sm:$0xf]
        %v291 = vld [vmem:[%s220 + $0x70] sm:$0xf]
        %v292 = vld [vmem:[%s220 + $0x74] sm:$0xf]
        %v293 = vld [vmem:[%s220 + $0x78] sm:$0xf]
        %v294 = vld [vmem:[%s220 + $0x7c] sm:$0xf]
        %v296 = vunpack.c.l.b16 %v262
        %v297 = vunpack.c.h.b16 %v262
        %v298 = vpack.c.b16 %v296, %v296
        %v299 = vpack.c.b16 %v297, %v297
        %v334 = vunpack.c.l.b16 %v263
        %v335 = vunpack.c.l.b16 %v264
        %v336 = vunpack.c.l.b16 %v265
        %v337 = vunpack.c.l.b16 %v266
        %v338 = vunpack.c.l.b16 %v267
        %v339 = vunpack.c.l.b16 %v268
        %v340 = vunpack.c.l.b16 %v269
        %v341 = vunpack.c.l.b16 %v270
        %v342 = vunpack.c.l.b16 %v271
        %v343 = vunpack.c.l.b16 %v272
        %v344 = vunpack.c.l.b16 %v273
        %v345 = vunpack.c.l.b16 %v274
        %v346 = vunpack.c.l.b16 %v275
        %v347 = vunpack.c.l.b16 %v276
        %v348 = vunpack.c.l.b16 %v277
        %v349 = vunpack.c.l.b16 %v278
        %v350 = vunpack.c.l.b16 %v279
        %v351 = vunpack.c.l.b16 %v280
        %v352 = vunpack.c.l.b16 %v281
        %v353 = vunpack.c.l.b16 %v282
        %v354 = vunpack.c.l.b16 %v283
        %v355 = vunpack.c.l.b16 %v284
        %v356 = vunpack.c.l.b16 %v285
        %v357 = vunpack.c.l.b16 %v286
        %v358 = vunpack.c.l.b16 %v287
        %v359 = vunpack.c.l.b16 %v288
        %v360 = vunpack.c.l.b16 %v289
        %v361 = vunpack.c.l.b16 %v290
        %v362 = vunpack.c.l.b16 %v291
        %v363 = vunpack.c.l.b16 %v292
        %v364 = vunpack.c.l.b16 %v293
        %v365 = vunpack.c.l.b16 %v294
        %v366 = vpack.c.b16 %v335, %v334
        %v367 = vpack.c.b16 %v337, %v336
        %v368 = vpack.c.b16 %v339, %v338
        %v369 = vpack.c.b16 %v341, %v340
        %v370 = vpack.c.b16 %v343, %v342
        %v371 = vpack.c.b16 %v345, %v344
        %v372 = vpack.c.b16 %v347, %v346
        %v373 = vpack.c.b16 %v349, %v348
        %v374 = vpack.c.b16 %v351, %v350
        %v375 = vpack.c.b16 %v353, %v352
        %v376 = vpack.c.b16 %v355, %v354
        %v377 = vpack.c.b16 %v357, %v356
        %v378 = vpack.c.b16 %v359, %v358
        %v379 = vpack.c.b16 %v361, %v360
        %v380 = vpack.c.b16 %v363, %v362
        %v381 = vpack.c.b16 %v365, %v364
        %398 = vmatprep.subr.bf16.mxu0 0
        %399 = vmatpush1.bf16.msra.mxu0 %v366
        %400 = vmatprep.subr.bf16.mxu0 0
        %401 = vmatpush1.bf16.msra.mxu0 %v367
        %402 = vmatprep.subr.bf16.mxu0 0
        %403 = vmatpush1.bf16.msra.mxu0 %v368
        %404 = vmatprep.subr.bf16.mxu0 0
        %405 = vmatpush1.bf16.msra.mxu0 %v369
        %406 = vmatprep.subr.bf16.mxu0 0
        %407 = vmatpush1.bf16.msra.mxu0 %v370
        %408 = vmatprep.subr.bf16.mxu0 0
        %409 = vmatpush1.bf16.msra.mxu0 %v371
        %410 = vmatprep.subr.bf16.mxu0 0
        %411 = vmatpush1.bf16.msra.mxu0 %v372
        %412 = vmatprep.subr.bf16.mxu0 0
        %413 = vmatpush1.bf16.msra.mxu0 %v373
        %414 = vmatprep.subr.bf16.mxu0 0
        %415 = vmatpush1.bf16.msra.mxu0 %v374
        %416 = vmatprep.subr.bf16.mxu0 0
        %417 = vmatpush1.bf16.msra.mxu0 %v375
        %418 = vmatprep.subr.bf16.mxu0 0
        %419 = vmatpush1.bf16.msra.mxu0 %v376
        %420 = vmatprep.subr.bf16.mxu0 0
        %421 = vmatpush1.bf16.msra.mxu0 %v377
        %422 = vmatprep.subr.bf16.mxu0 0
        %423 = vmatpush1.bf16.msra.mxu0 %v378
        %424 = vmatprep.subr.bf16.mxu0 0
        %425 = vmatpush1.bf16.msra.mxu0 %v379
        %426 = vmatprep.subr.bf16.mxu0 0
        %427 = vmatpush1.bf16.msra.mxu0 %v380
        %428 = vmatprep.subr.bf16.mxu0 0
        %429 = vmatpush1.bf16.msra.mxu0 %v381
        %430 = vmatprep.mubr.bf16.mxu0 %v299
        %431 = vmatmul.mubr.bf16.gmra.mrb[0].mxu0 %v298
        %v432 = vpop.f32.mrb[0].mxu0
        %v433 = vadd.f32 0.0, %v432
        %v434 = vpop.f32.mrb[0].mxu0
        %v435 = vpop.f32.mrb[0].mxu0
        %v436 = vpop.f32.mrb[0].mxu0
        %437 = vdwg.mxu0
        %v438 = vadd.f32 %v257, %v433
        %439 = vst [vmem:[#allocation2] sm:$0xff] %v438
        %p440 = scmp.eq.s32.totalorder %s28, 3
        // Predicated region
        $region45: #{tpu_custom_call.1} parent=31 // pred_check
          %p441 = pneg %p440
        $region46: #{tpu_custom_call.1} parent=31 // pred_check_branch
          %443 = sbr.rel (%p441) target = $region48
        $region47: #{tpu_custom_call.1} parent=31 // pred_region
          %v444 = vld [vmem:[#allocation2] sm:$0xff]
          %v445 = vld [vmem:[%s249] sm:$0x1]
          %v447 = vlaneseq
          %v448 = vshrl.u32 %v447, 7
          %v449 = vsub.s32 0, %v448
          %v450 = vrot.slane %v445, %v449
          %v452 = vadd.f32 %v444, %v450
          %v453 = vmax.f32 %v452, 0.0
          %v454 = vpack.c.bf16 %v453, %v453
          %455 = vst [vmem:[%s245] sm:$0xf] %v454
        $region48: #{tpu_custom_call.1} parent=31 // pred_fallthru
          _
        %s456 = sand.u32 %s130, 1
        %s457 = scalar_lea.sflag [#allocation5], %s456
        %s458 = sand.u32 %s130, 1
        %s459 = smul.addr %s458, 4
        %s460 = scalar_lea.vmem [#allocation8], %s459
        // Predicated region
        $region49: #{tpu_custom_call.1} parent=31 // pred_check
          %p461 = pneg %p140
        $region50: #{tpu_custom_call.1} parent=31 // pred_check_branch
          %463 = sbr.rel (%p461) target = $region52
        $region51: #{tpu_custom_call.1} parent=31 // pred_region
          %s465 = ssub.s32 64, 64
          %466 = vsyncadd %s457, %s465
          %s467 = smul.addr %s26, 4
          %s468 = sadd.s32 %s27, %s467
          %s469 = smul.addr %s468, 64
          %s470 = scalar_lea.hbm %s3, %s469
          %s472 = sshll.u32 %s460, 4
          %s473 = int_to_ptr.vmem [resolvable:$true] %s472
          %475 = dma.vmem_to_hbm [thread:$0]  %s473, 64, %s470, %s457
        $region52: #{tpu_custom_call.1} parent=31 // pred_fallthru
          _
      $region32: #{tpu_custom_call.1} parent=5 // pred_fallthru
        _
      %p476 = scmp.le.s32.totalorder 2, %s16
      // Predicated region
      $region53: #{tpu_custom_call.1} parent=5 // pred_check
        %p477 = pneg %p476
      $region54: #{tpu_custom_call.1} parent=5 // pred_check_branch
        %479 = sbr.rel (%p477) target = $region56
      $region55: #{tpu_custom_call.1} parent=5 // pred_region
        %s480 = ssub.s32 %s16, 2
        // Predicated region
        $region57: #{tpu_custom_call.1} parent=55 // pred_check
          %p481 = pneg %p146
        $region58: #{tpu_custom_call.1} parent=55 // pred_check_branch
          %483 = sbr.rel (%p481) target = $region60
        $region59: #{tpu_custom_call.1} parent=55 // pred_region
          %s484 = sand.u32 %s131, 1
          %s485 = scalar_lea.sflag [#allocation5], %s484
          %s486 = sand.u32 %s131, 1
          %s487 = smul.addr %s486, 4
          %s488 = scalar_lea.vmem [#allocation8], %s487
          %489 = dma.done %s485, 64
        $region60: #{tpu_custom_call.1} parent=55 // pred_fallthru
          _
      $region56: #{tpu_custom_call.1} parent=5 // pred_fallthru
        _
    $region6: #{tpu_custom_call.1} parent=1 // loop_footer
      %s20 = sadd.s32 1, %s16
    $region7: #{tpu_custom_call.1} parent=1 // loop_footer_branch
      %15 = sbr.rel target = $region3
    $region8: #{tpu_custom_call.1} parent=1 // loop_exit
      _
    %490 = vsyncpa [#allocation4], 1
    %s491 = scalar_lea.sflag [#allocation4], 1
    %492 = vsyncpa %s491, 1
    %493 = vsyncpa [#allocation7], 1
    %s494 = scalar_lea.sflag [#allocation7], 1
    %495 = vsyncpa %s494, 1
    %496 = vsyncpa [#allocation5], 1
    %s497 = scalar_lea.sflag [#allocation5], 1
    %498 = vsyncpa %s497, 1

// kernel: tpu_custom_call.1
$region0: #{tpu_custom_call.1}
  #allocation0 [shape = 'u32[]', space=smem, size = 0x4, offset = 0x4, fixed_abs, tag = 'smem constant byte address 0x4 - core index']
  #allocation1 [shape = 'u32[144,128]{1,0:T(1,128)}', space=vmem, size = 0x12000, scoped, tag = 'internal scratch']
  #allocation2 [shape = 'f32[8,128]{1,0:T(8,128)}', space=vmem, size = 0x1000, scoped, tag = 'scratch operand']
  %s0 = inlined_call_operand.hbm [shape: bf16[8,1024], index: 0, kind: input, shape index: {}]
  %s1 = inlined_call_operand.hbm [shape: bf16[1024,512], index: 1, kind: input, shape index: {}]
  %s2 = inlined_call_operand.vmem [shape: f32[1,512], index: 2, kind: input, shape index: {}]
  %s3 = inlined_call_operand.hbm [shape: bf16[8,512], index: 3, kind: output, shape index: {}]
  %s4 = sld [smem:[#allocation0]]
  $region61: #{tpu_custom_call.1} parent=0
    _
  %s6 = ssub.s32 1, %s4
  %s7 = scalar_select 0, %s6, %s4
  $region1: #{tpu_custom_call.1} parent=0
    #allocation3 [shape = 'u8[16384]{0}', space=vmem, size = 0x4000, scoped, tag = 'input window, operand 0, single buffered']
    #allocation4 [shape = 's32[2]{0}', space=sflag, size = 0x8, scoped, tag = 'scoped memory for tpu_custom_call.1']
    #allocation5 [shape = 's32[2]{0}', space=sflag, size = 0x8, scoped, tag = 'scoped memory for tpu_custom_call.1']
    #allocation6 [shape = 'u8[131072]{0}', space=vmem, size = 0x20000, scoped, tag = 'input window, operand 1']
    #allocation7 [shape = 's32[2]{0}', space=sflag, size = 0x8, scoped, tag = 'scoped memory for tpu_custom_call.1']
    #allocation8 [shape = 'u8[4096]{0}', space=vmem, size = 0x1000, scoped, tag = 'output window, operand 0']
    %8 = vsyncpa [#allocation4], 0
    %9 = vsyncpa [#allocation7], 0
    %s10 = scalar_lea.sflag [#allocation7], 1
    %11 = vsyncpa %s10, 0
    %12 = vsyncpa [#allocation5], 0
    %s13 = scalar_lea.sflag [#allocation5], 1
    %14 = vsyncpa %s13, 0
    loop: start=0, step=1, limit=18
    $region2: #{tpu_custom_call.1} parent=1 // loop_pre_header
      _
    $region3: #{tpu_custom_call.1} parent=1 // loop_header
      %s16 = sphi 0, %s20
      %p17 = scmp.ge.s32.totalorder %s16, 18
      %s23 = sphi 0, %s42
      %s24 = sphi 0, %s38
      %s25 = sphi 0, %s34
      %s26 = sphi 0, %s23
      %s27 = sphi 0, %s24
      %s28 = sphi 0, %s25
      %s29 = sphi 0, %s26
      %s30 = sphi 0, %s27
      %s31 = sphi 0, %s28
      %s45 = sphi 0, %s47
      %s48 = sphi 0, %s45
      %s49 = sphi 0, %s48
      %s65 = sphi 0, %s49
      %s73 = sphi 0, %s75
      %s76 = sphi 0, %s73
      %s77 = sphi 0, %s76
      %s93 = sphi 0, %s77
      %s99 = sphi 0, %s101
      %s102 = sphi 0, %s99
      %s103 = sphi 0, %s102
      %s119 = sphi 0, %s103
      %s127 = sphi 0, %s129
      %s130 = sphi 0, %s127
      %s131 = sphi 0, %s130
      %s147 = sphi 0, %s131
    $region4: #{tpu_custom_call.1} parent=1 // loop_header_branch
      %19 = sbr.rel (%p17) target = $region8
    $region5: #{tpu_custom_call.1} parent=1 // loop_body
      %s21 = ssub.s32 %s16, 1
      %s22 = ssub.s32 %s16, 2
      %s32 = sadd.s32 1, %s25
      %p33 = scmp.ge.s32.totalorder %s32, 4
      %s34 = scalar_select %p33, 0, %s32
      %s35 = sadd.s32 1, %s24
      %s36 = scalar_select %p33, %s35, %s24
      %p37 = scmp.ge.s32.totalorder %s36, 4
      %s38 = scalar_select %p37, 0, %s36
      %s39 = sadd.s32 1, %s23
      %s40 = scalar_select %p37, %s39, %s23
      %p41 = scmp.ge.s32.totalorder %s40, 1
      %s42 = scalar_select %p41, 0, %s40
      %s43 = ssub.s32 %s23, %s42
      %p44 = scmp.eq.s32.totalorder %s43, 0
      %s46 = sadd.s32 %s45, 1
      %s47 = scalar_select %p44, %s45, %s46
      %p50 = pneg %p44
      %p51 = scmp.eq.s32.totalorder %s16, 15
      %p52 = por %p50, %p51
      %p53 = scmp.ne.s32.totalorder %s45, %s48
      %p54 = scmp.eq.s32.totalorder %s16, 0
      %p55 = por %p53, %p54
      %p56 = scmp.ne.s32.totalorder %s45, %s48
      %p57 = scmp.eq.s32.totalorder %s21, 15
      %p58 = por %p56, %p57
      %p59 = scmp.ne.s32.totalorder %s48, %s49
      %p60 = scmp.eq.s32.totalorder %s21, 0
      %p61 = por %p59, %p60
      %p62 = scmp.ne.s32.totalorder %s48, %s49
      %p63 = scmp.eq.s32.totalorder %s22, 15
      %p64 = por %p62, %p63
      %p66 = scmp.ne.s32.totalorder %s49, %s65
      %p67 = scmp.eq.s32.totalorder %s22, 0
      %p68 = por %p66, %p67
      %s69 = ssub.s32 %s25, %s34
      %s70 = ssub.s32 %s24, %s38
      %s71 = sor.u32 %s69, %s70
      %p72 = scmp.eq.s32.totalorder %s71, 0
      %s74 = sadd.s32 %s73, 1
      %s75 = scalar_select %p72, %s73, %s74
      %p78 = pneg %p72
      %p79 = scmp.eq.s32.totalorder %s16, 15
      %p80 = por %p78, %p79
      %p81 = scmp.ne.s32.totalorder %s73, %s76
      %p82 = scmp.eq.s32.totalorder %s16, 0
      %p83 = por %p81, %p82
      %p84 = scmp.ne.s32.totalorder %s73, %s76
      %p85 = scmp.eq.s32.totalorder %s21, 15
      %p86 = por %p84, %p85
      %p87 = scmp.ne.s32.totalorder %s76, %s77
      %p88 = scmp.eq.s32.totalorder %s21, 0
      %p89 = por %p87, %p88
      %p90 = scmp.ne.s32.totalorder %s76, %s77
      %p91 = scmp.eq.s32.totalorder %s22, 15
      %p92 = por %p90, %p91
      %p94 = scmp.ne.s32.totalorder %s77, %s93
      %p95 = scmp.eq.s32.totalorder %s22, 0
      %p96 = por %p94, %p95
      %s97 = ssub.s32 %s24, %s38
      %p98 = scmp.eq.s32.totalorder %s97, 0
      %s100 = sadd.s32 %s99, 1
      %s101 = scalar_select %p98, %s99, %s100
      %p104 = pneg %p98
      %p105 = scmp.eq.s32.totalorder %s16, 15
      %p106 = por %p104, %p105
      %p107 = scmp.ne.s32.totalorder %s99, %s102
      %p108 = scmp.eq.s32.totalorder %s16, 0
      %p109 = por %p107, %p108
      %p110 = scmp.ne.s32.totalorder %s99, %s102
      %p111 = scmp.eq.s32.totalorder %s21, 15
      %p112 = por %p110, %p111
      %p113 = scmp.ne.s32.totalorder %s102, %s103
      %p114 = scmp.eq.s32.totalorder %s21, 0
      %p115 = por %p113, %p114
      %p116 = scmp.ne.s32.totalorder %s102, %s103
      %p117 = scmp.eq.s32.totalorder %s22, 15
      %p118 = por %p116, %p117
      %p120 = scmp.ne.s32.totalorder %s103, %s119
      %p121 = scmp.eq.s32.totalorder %s22, 0
      %p122 = por %p120, %p121
      %s123 = ssub.s32 %s23, %s42
      %s124 = ssub.s32 %s24, %s38
      %s125 = sor.u32 %s123, %s124
      %p126 = scmp.eq.s32.totalorder %s125, 0
      %s128 = sadd.s32 %s127, 1
      %s129 = scalar_select %p126, %s127, %s128
      %p132 = pneg %p126
      %p133 = scmp.eq.s32.totalorder %s16, 15
      %p134 = por %p132, %p133
      %p135 = scmp.ne.s32.totalorder %s127, %s130
      %p136 = scmp.eq.s32.totalorder %s16, 0
      %p137 = por %p135, %p136
      %p138 = scmp.ne.s32.totalorder %s127, %s130
      %p139 = scmp.eq.s32.totalorder %s21, 15
      %p140 = por %p138, %p139
      %p141 = scmp.ne.s32.totalorder %s130, %s131
      %p142 = scmp.eq.s32.totalorder %s21, 0
      %p143 = por %p141, %p142
      %p144 = scmp.ne.s32.totalorder %s130, %s131
      %p145 = scmp.eq.s32.totalorder %s22, 15
      %p146 = por %p144, %p145
      %p148 = scmp.ne.s32.totalorder %s131, %s147
      %p149 = scmp.eq.s32.totalorder %s22, 0
      %p150 = por %p148, %p149
      %p151 = scmp.le.s32.totalorder 1, %s16
      %p152 = scmp.lt.s32.totalorder %s16, 17
      %p153 = pnand %p151, %p152
      %p154 = pneg %p153
      // Predicated region
      $region9: #{tpu_custom_call.1} parent=5 // pred_check
        _
      $region10: #{tpu_custom_call.1} parent=5 // pred_check_branch
        %156 = sbr.rel (%p153) target = $region12
      $region11: #{tpu_custom_call.1} parent=5 // pred_region
        %s157 = ssub.s32 %s16, 1
        // Predicated region
        $region13: #{tpu_custom_call.1} parent=11 // pred_check
          %p158 = pneg %p61
        $region14: #{tpu_custom_call.1} parent=11 // pred_check_branch
          %160 = sbr.rel (%p158) target = $region16
        $region15: #{tpu_custom_call.1} parent=11 // pred_region
          %s162 = ssub.s32 512, 512
          %163 = vsyncadd [#allocation4], %s162
          %s164 = smul.addr %s26, 8
          %s165 = smul.addr %s164, 64
          %s166 = scalar_lea.hbm %s0, %s165
          %s168 = sshll.u32 [#allocation3], 4
          %s169 = int_to_ptr.vmem [resolvable:$true] %s168
          %171 = dma.hbm_to_vmem [thread:$0]  %s166, 512, %s169, [#allocation4]
        $region16: #{tpu_custom_call.1} parent=11 // pred_fallthru
          _
      $region12: #{tpu_custom_call.1} parent=5 // pred_fallthru
        _
      %p172 = scmp.lt.s32.totalorder %s16, 16
      // Predicated region
      $region17: #{tpu_custom_call.1} parent=5 // pred_check
        %p173 = pneg %p172
      $region18: #{tpu_custom_call.1} parent=5 // pred_check_branch
        %175 = sbr.rel (%p173) target = $region20
      $region19: #{tpu_custom_call.1} parent=5 // pred_region
        // Predicated region
        $region21: #{tpu_custom_call.1} parent=19 // pred_check
          %p176 = pneg %p83
        $region22: #{tpu_custom_call.1} parent=19 // pred_check_branch
          %178 = sbr.rel (%p176) target = $region24
        $region23: #{tpu_custom_call.1} parent=19 // pred_region
          %s179 = sand.u32 %s73, 1
          %s180 = scalar_lea.sflag [#allocation7], %s179
          %s181 = sand.u32 %s73, 1
          %s182 = smul.addr %s181, 128
          %s183 = scalar_lea.vmem [#allocation6], %s182
          %s184 = smul.u32 32, %s25
          %s186 = ssub.s32 2048, 2048
          %187 = vsyncadd %s180, %s186
          %s188 = smul.addr %s184, 4
          %s189 = sadd.s32 %s24, %s188
          %s190 = smul.addr %s189, 64
          %s191 = scalar_lea.hbm %s1, %s190
          %s192 = sshll.u32 %s183, 4
          %s193 = int_to_ptr.vmem [resolvable:$true] %s192
          %198 = dma.hbm_to_vmem [thread:$0]  %s191, 2048, %s193, %s180, 256, 64, 4
        $region24: #{tpu_custom_call.1} parent=19 // pred_fallthru
          _
        // Predicated region
        $region25: #{tpu_custom_call.1} parent=19 // pred_check
          %p199 = pneg %p109
        $region26: #{tpu_custom_call.1} parent=19 // pred_check_branch
          %201 = sbr.rel (%p199) target = $region28
        $region27: #{tpu_custom_call.1} parent=19 // pred_region
          %p202 = scmp.lt.s32.totalorder %s24, 3
          %s203 = scalar_select %p202, %s24, 3
          %s204 = scalar_lea.vmem %s2, %s203
        $region28: #{tpu_custom_call.1} parent=19 // pred_fallthru
          _
      $region20: #{tpu_custom_call.1} parent=5 // pred_fallthru
        _
      %p205 = scmp.le.s32.totalorder 1, %s16
      %p206 = scmp.lt.s32.totalorder %s16, 17
      %p207 = pnand %p205, %p206
      %p208 = pneg %p207
      // Predicated region
      $region29: #{tpu_custom_call.1} parent=5 // pred_check
        _
      $region30: #{tpu_custom_call.1} parent=5 // pred_check_branch
        %210 = sbr.rel (%p207) target = $region32
      $region31: #{tpu_custom_call.1} parent=5 // pred_region
        %s211 = ssub.s32 %s16, 1
        // Predicated region
        $region33: #{tpu_custom_call.1} parent=31 // pred_check
          %p212 = pneg %p61
        $region34: #{tpu_custom_call.1} parent=31 // pred_check_branch
          %214 = sbr.rel (%p212) target = $region36
        $region35: #{tpu_custom_call.1} parent=31 // pred_region
          %215 = dma.done [#allocation4], 512
        $region36: #{tpu_custom_call.1} parent=31 // pred_fallthru
          _
        %s216 = sand.u32 %s76, 1
        %s217 = scalar_lea.sflag [#allocation7], %s216
        %s218 = sand.u32 %s76, 1
        %s219 = smul.addr %s218, 128
        %s220 = scalar_lea.vmem [#allocation6], %s219
        // Predicated region
        $region37: #{tpu_custom_call.1} parent=31 // pred_check
          %p221 = pneg %p89
        $region38: #{tpu_custom_call.1} parent=31 // pred_check_branch
          %223 = sbr.rel (%p221) target = $region40
        $region39: #{tpu_custom_call.1} parent=31 // pred_region
          %224 = dma.done %s217, 2048
        $region40: #{tpu_custom_call.1} parent=31 // pred_fallthru
          _
        %p225 = pneg %p61
        %p226 = pneg %p58
        %s227 = sand.u32 %s76, 1
        %s228 = scalar_lea.sflag [#allocation7], %s227
        %s229 = sand.u32 %s76, 1
        %s230 = smul.addr %s229, 128
        %s231 = scalar_lea.vmem [#allocation6], %s230
        %p232 = pneg %p89
        %p233 = pneg %p86
        %p234 = scmp.lt.s32.totalorder %s27, 3
        %s235 = scalar_select %p234, %s27, 3
        %s236 = scalar_lea.vmem %s2, %s235
        %p237 = pneg %p115
        %p238 = pneg %p112
        %p239 = pneg %p143
        %p240 = pneg %p140
        %s241 = sand.u32 %s130, 1
        %s242 = scalar_lea.sflag [#allocation5], %s241
        %s243 = sand.u32 %s130, 1
        %s244 = smul.addr %s243, 4
        %s245 = scalar_lea.vmem [#allocation8], %s244
        %s246 = smul.u32 32, %s28
        %p247 = scmp.lt.s32.totalorder %s27, 3
        %s248 = scalar_select %p247, %s27, 3
        %s249 = scalar_lea.vmem %s2, %s248
        %p251 = scmp.eq.s32.totalorder %s28, 0
        // Predicated region
        $region41: #{tpu_custom_call.1} parent=31 // pred_check
          %p252 = pneg %p251
        $region42: #{tpu_custom_call.1} parent=31 // pred_check_branch
          %254 = sbr.rel (%p252) target = $region44
        $region43: #{tpu_custom_call.1} parent=31 // pred_region
          %255 = vst [vmem:[#allocation2] sm:$0xff] 0.0
        $region44: #{tpu_custom_call.1} parent=31 // pred_fallthru
          _
        %s256 = smul.u32 %s28, 256
        %v257 = vld [vmem:[#allocation2] sm:$0xff]
        %s258 = sshra.s32 %s256, 7
        %s259 = sand.u32 %s256, 127
        %s260 = smul.addr %s258, 4
        %s261 = scalar_lea.vmem [#allocation3], %s260
        %v262 = vld [vmem:[%s261] sm:$0xff]
        %v263 = vld [vmem:[%s220] sm:$0xf]
        %v264 = vld [vmem:[%s220 + $0x4] sm:$0xf]
        %v265 = vld [vmem:[%s220 + $0x8] sm:$0xf]
        %v266 = vld [vmem:[%s220 + $0xc] sm:$0xf]
        %v267 = vld [vmem:[%s220 + $0x10] sm:$0xf]
        %v268 = vld [vmem:[%s220 + $0x14] sm:$0xf]
        %v269 = vld [vmem:[%s220 + $0x18] sm:$0xf]
        %v270 = vld [vmem:[%s220 + $0x1c] sm:$0xf]
        %v271 = vld [vmem:[%s220 + $0x20] sm:$0xf]
        %v272 = vld [vmem:[%s220 + $0x24] sm:$0xf]
        %v273 = vld [vmem:[%s220 + $0x28] sm:$0xf]
        %v274 = vld [vmem:[%s220 + $0x2c] sm:$0xf]
        %v275 = vld [vmem:[%s220 + $0x30] sm:$0xf]
        %v276 = vld [vmem:[%s220 + $0x34] sm:$0xf]
        %v277 = vld [vmem:[%s220 + $0x38] sm:$0xf]
        %v278 = vld [vmem:[%s220 + $0x3c] sm:$0xf]
        %v279 = vld [vmem:[%s220 + $0x40] sm:$0xf]
        %v280 = vld [vmem:[%s220 + $0x44] sm:$0xf]
        %v281 = vld [vmem:[%s220 + $0x48] sm:$0xf]
        %v282 = vld [vmem:[%s220 + $0x4c] sm:$0xf]
        %v283 = vld [vmem:[%s220 + $0x50] sm:$0xf]
        %v284 = vld [vmem:[%s220 + $0x54] sm:$0xf]
        %v285 = vld [vmem:[%s220 + $0x58] sm:$0xf]
        %v286 = vld [vmem:[%s220 + $0x5c] sm:$0xf]
        %v287 = vld [vmem:[%s220 + $0x60] sm:$0xf]
        %v288 = vld [vmem:[%s220 + $0x64] sm:$0xf]
        %v289 = vld [vmem:[%s220 + $0x68] sm:$0xf]
        %v290 = vld [vmem:[%s220 + $0x6c] sm:$0xf]
        %v291 = vld [vmem:[%s220 + $0x70] sm:$0xf]
        %v292 = vld [vmem:[%s220 + $0x74] sm:$0xf]
        %v293 = vld [vmem:[%s220 + $0x78] sm:$0xf]
        %v294 = vld [vmem:[%s220 + $0x7c] sm:$0xf]
        %v296 = vunpack.c.l.b16 %v262
        %v297 = vunpack.c.h.b16 %v262
        %v298 = vpack.c.b16 %v296, %v296
        %v299 = vpack.c.b16 %v297, %v297
        %v334 = vunpack.c.l.b16 %v263
        %v335 = vunpack.c.l.b16 %v264
        %v336 = vunpack.c.l.b16 %v265
        %v337 = vunpack.c.l.b16 %v266
        %v338 = vunpack.c.l.b16 %v267
        %v339 = vunpack.c.l.b16 %v268
        %v340 = vunpack.c.l.b16 %v269
        %v341 = vunpack.c.l.b16 %v270
        %v342 = vunpack.c.l.b16 %v271
        %v343 = vunpack.c.l.b16 %v272
        %v344 = vunpack.c.l.b16 %v273
        %v345 = vunpack.c.l.b16 %v274
        %v346 = vunpack.c.l.b16 %v275
        %v347 = vunpack.c.l.b16 %v276
        %v348 = vunpack.c.l.b16 %v277
        %v349 = vunpack.c.l.b16 %v278
        %v350 = vunpack.c.l.b16 %v279
        %v351 = vunpack.c.l.b16 %v280
        %v352 = vunpack.c.l.b16 %v281
        %v353 = vunpack.c.l.b16 %v282
        %v354 = vunpack.c.l.b16 %v283
        %v355 = vunpack.c.l.b16 %v284
        %v356 = vunpack.c.l.b16 %v285
        %v357 = vunpack.c.l.b16 %v286
        %v358 = vunpack.c.l.b16 %v287
        %v359 = vunpack.c.l.b16 %v288
        %v360 = vunpack.c.l.b16 %v289
        %v361 = vunpack.c.l.b16 %v290
        %v362 = vunpack.c.l.b16 %v291
        %v363 = vunpack.c.l.b16 %v292
        %v364 = vunpack.c.l.b16 %v293
        %v365 = vunpack.c.l.b16 %v294
        %v366 = vpack.c.b16 %v335, %v334
        %v367 = vpack.c.b16 %v337, %v336
        %v368 = vpack.c.b16 %v339, %v338
        %v369 = vpack.c.b16 %v341, %v340
        %v370 = vpack.c.b16 %v343, %v342
        %v371 = vpack.c.b16 %v345, %v344
        %v372 = vpack.c.b16 %v347, %v346
        %v373 = vpack.c.b16 %v349, %v348
        %v374 = vpack.c.b16 %v351, %v350
        %v375 = vpack.c.b16 %v353, %v352
        %v376 = vpack.c.b16 %v355, %v354
        %v377 = vpack.c.b16 %v357, %v356
        %v378 = vpack.c.b16 %v359, %v358
        %v379 = vpack.c.b16 %v361, %v360
        %v380 = vpack.c.b16 %v363, %v362
        %v381 = vpack.c.b16 %v365, %v364
        %398 = vmatprep.subr.bf16.mxu0 0
        %399 = vmatpush1.bf16.msra.mxu0 %v366
        %400 = vmatprep.subr.bf16.mxu0 0
        %401 = vmatpush1.bf16.msra.mxu0 %v367
        %402 = vmatprep.subr.bf16.mxu0 0
        %403 = vmatpush1.bf16.msra.mxu0 %v368
        %404 = vmatprep.subr.bf16.mxu0 0
        %405 = vmatpush1.bf16.msra.mxu0 %v369
        %406 = vmatprep.subr.bf16.mxu0 0
        %407 = vmatpush1.bf16.msra.mxu0 %v370
        %408 = vmatprep.subr.bf16.mxu0 0
        %409 = vmatpush1.bf16.msra.mxu0 %v371
        %410 = vmatprep.subr.bf16.mxu0 0
        %411 = vmatpush1.bf16.msra.mxu0 %v372
        %412 = vmatprep.subr.bf16.mxu0 0
        %413 = vmatpush1.bf16.msra.mxu0 %v373
        %414 = vmatprep.subr.bf16.mxu0 0
        %415 = vmatpush1.bf16.msra.mxu0 %v374
        %416 = vmatprep.subr.bf16.mxu0 0
        %417 = vmatpush1.bf16.msra.mxu0 %v375
        %418 = vmatprep.subr.bf16.mxu0 0
        %419 = vmatpush1.bf16.msra.mxu0 %v376
        %420 = vmatprep.subr.bf16.mxu0 0
        %421 = vmatpush1.bf16.msra.mxu0 %v377
        %422 = vmatprep.subr.bf16.mxu0 0
        %423 = vmatpush1.bf16.msra.mxu0 %v378
        %424 = vmatprep.subr.bf16.mxu0 0
        %425 = vmatpush1.bf16.msra.mxu0 %v379
        %426 = vmatprep.subr.bf16.mxu0 0
        %427 = vmatpush1.bf16.msra.mxu0 %v380
        %428 = vmatprep.subr.bf16.mxu0 0
        %429 = vmatpush1.bf16.msra.mxu0 %v381
        %430 = vmatprep.mubr.bf16.mxu0 %v299
        %431 = vmatmul.mubr.bf16.gmra.mrb[0].mxu0 %v298
        %v432 = vpop.f32.mrb[0].mxu0
        %v433 = vadd.f32 0.0, %v432
        %v434 = vpop.f32.mrb[0].mxu0
        %v435 = vpop.f32.mrb[0].mxu0
        %v436 = vpop.f32.mrb[0].mxu0
        %437 = vdwg.mxu0
        %v438 = vadd.f32 %v257, %v433
        %439 = vst [vmem:[#allocation2] sm:$0xff] %v438
        %p440 = scmp.eq.s32.totalorder %s28, 3
        // Predicated region
        $region45: #{tpu_custom_call.1} parent=31 // pred_check
          %p441 = pneg %p440
        $region46: #{tpu_custom_call.1} parent=31 // pred_check_branch
          %443 = sbr.rel (%p441) target = $region48
        $region47: #{tpu_custom_call.1} parent=31 // pred_region
          %v444 = vld [vmem:[#allocation2] sm:$0xff]
          %v445 = vld [vmem:[%s249] sm:$0x1]
          %v447 = vlaneseq
          %v448 = vshrl.u32 %v447, 7
          %v449 = vsub.s32 0, %v448
          %v450 = vrot.slane %v445, %v449
          %v452 = vadd.f32 %v444, %v450
          %v453 = vmax.f32 %v452, 0.0
          %v454 = vpack.c.bf16 %v453, %v453
          %455 = vst [vmem:[%s245] sm:$0xf] %v454
        $region48: #{tpu_custom_call.1} parent=31 // pred_fallthru
          _
        %s456 = sand.u32 %s130, 1
        %s457 = scalar_lea.sflag [#allocation5], %s456
        %s458 = sand.u32 %s130, 1
        %s459 = smul.addr %s458, 4
        %s460 = scalar_lea.vmem [#allocation8], %s459
        // Predicated region
        $region49: #{tpu_custom_call.1} parent=31 // pred_check
          %p461 = pneg %p140
        $region50: #{tpu_custom_call.1} parent=31 // pred_check_branch
          %463 = sbr.rel (%p461) target = $region52
        $region51: #{tpu_custom_call.1} parent=31 // pred_region
          %s465 = ssub.s32 64, 64
          %466 = vsyncadd %s457, %s465
          %s467 = smul.addr %s26, 4
          %s468 = sadd.s32 %s27, %s467
          %s469 = smul.addr %s468, 64
          %s470 = scalar_lea.hbm %s3, %s469
          %s472 = sshll.u32 %s460, 4
          %s473 = int_to_ptr.vmem [resolvable:$true] %s472
          %475 = dma.vmem_to_hbm [thread:$0]  %s473, 64, %s470, %s457
        $region52: #{tpu_custom_call.1} parent=31 // pred_fallthru
          _
      $region32: #{tpu_custom_call.1} parent=5 // pred_fallthru
        _
      %p476 = scmp.le.s32.totalorder 2, %s16
      // Predicated region
      $region53: #{tpu_custom_call.1} parent=5 // pred_check
        %p477 = pneg %p476
      $region54: #{tpu_custom_call.1} parent=5 // pred_check_branch
        %479 = sbr.rel (%p477) target = $region56
      $region55: #{tpu_custom_call.1} parent=5 // pred_region
        %s480 = ssub.s32 %s16, 2
        // Predicated region
        $region57: #{tpu_custom_call.1} parent=55 // pred_check
          %p481 = pneg %p146
        $region58: #{tpu_custom_call.1} parent=55 // pred_check_branch
          %483 = sbr.rel (%p481) target = $region60
        $region59: #{tpu_custom_call.1} parent=55 // pred_region
          %s484 = sand.u32 %s131, 1
          %s485 = scalar_lea.sflag [#allocation5], %s484
          %s486 = sand.u32 %s131, 1
          %s487 = smul.addr %s486, 4
          %s488 = scalar_lea.vmem [#allocation8], %s487
          %489 = dma.done %s485, 64
        $region60: #{tpu_custom_call.1} parent=55 // pred_fallthru
          _
      $region56: #{tpu_custom_call.1} parent=5 // pred_fallthru
        _
    $region6: #{tpu_custom_call.1} parent=1 // loop_footer
      %s20 = sadd.s32 1, %s16
    $region7: #{tpu_custom_call.1} parent=1 // loop_footer_branch
      %15 = sbr.rel target = $region3
    $region8: #{tpu_custom_call.1} parent=1 // loop_exit
      _
    %490 = vsyncpa [#allocation4], 1
    %s491 = scalar_lea.sflag [#allocation4], 1
    %492 = vsyncpa %s491, 1
    %493 = vsyncpa [#allocation7], 1
    %s494 = scalar_lea.sflag [#allocation7], 1
    %495 = vsyncpa %s494, 1
    %496 = vsyncpa [#allocation5], 1
    %s497 = scalar_lea.sflag [#allocation5], 1
    %498 = vsyncpa %s497, 1

</llo_original>
